<compile_context>
chip_gen: v5e
topology: v5e:2x2
jax: 0.10.0
libtpu: 0.0.40
codegen_flags: <defaults>
</compile_context>

<pallas_src>
import functools

import jax
import jax.numpy as jnp
from jax import lax
from jax.experimental import pallas as pl
from jax.experimental.pallas import tpu as pltpu

BN_EPS = 1e-5


def _softmax_axis1(s):
    """Softmax over axis 1 of a (BB, R, C) tile (the seq / pseudo-label axis)."""
    m = jnp.max(s, axis=1, keepdims=True)
    e = jnp.exp(s - m)
    denom = jnp.sum(e, axis=1, keepdims=True)
    # divide -> EUP reciprocal (approx): frees VALU slots, EUP otherwise idle.
    return e * pl.reciprocal(denom, approx=True)


def dpla_kernel(x_ref, scale_ref,
                w_in_ref, b_in_ref,
                w_fc_ref, sh1_ref,
                w_lwa_ref, b_lwa_ref,
                w_out_ref, sh2_ref,
                w_olwa_ref, b_olwa_ref,
                *out_refs,
                return_attn, compute_dtype):
    if return_attn:
        out_ref, attn0_ref, attn1_ref, attn2_ref = out_refs
    else:
        (out_ref,) = out_refs
        attn0_ref = attn1_ref = attn2_ref = None

    BB, S, D = x_ref.shape
    M = w_in_ref.shape[1]
    Ddk = w_out_ref.shape[1]
    C = w_olwa_ref.shape[1]
    f32 = jnp.float32
    cd = compute_dtype

    scale = scale_ref[...]                             # (BB, 1, 1) per-batch enhance scale
    x_c = x_ref[...].astype(cd)                        # single cast of the input tile
    x2 = x_c.reshape(BB * S, D)                        # fold batch into matmul rows

    # ---- input labelwise attention: score = inLWA(x); softmax over seq ----
    score = jnp.dot(x2, w_in_ref[...].astype(cd),
                    preferred_element_type=f32) + b_in_ref[...]
    alpha = _softmax_axis1(score.reshape(BB, S, M))    # (BB, S, M)
    if return_attn:
        attn0_ref[...] = alpha
    # enhance + pool in one batched contraction (alpha^T @ x per batch)
    alpha_t = jnp.swapaxes(alpha * scale, 1, 2).astype(cd)          # (BB, M, S)
    a_nofc = jnp.einsum('bms,bsd->bmd', alpha_t, x_c,
                        preferred_element_type=f32)                 # (BB, M, D)
    a_nofc2 = a_nofc.reshape(BB * M, D)

    # ---- hidden block (L = 1): FC(+folded BN) -> ReLU -> LWA -> pool + residual ----
    a = jnp.dot(a_nofc2.astype(cd), w_fc_ref[...].astype(cd),
                preferred_element_type=f32) + sh1_ref[...]
    a_pre = jnp.maximum(a, 0.0)                        # (BB*M, D); dropout == identity
    a_pre_c = a_pre.astype(cd)
    score = jnp.dot(a_pre_c, w_lwa_ref[...].astype(cd),
                    preferred_element_type=f32) + b_lwa_ref[...]
    alpha = _softmax_axis1(score.reshape(BB, M, M))    # (BB, M, M)
    if return_attn:
        attn1_ref[...] = alpha
    alpha_t = jnp.swapaxes(alpha * scale, 1, 2).astype(cd)          # (BB, M, M)
    a_nofc = jnp.einsum('bmr,brd->bmd', alpha_t, a_pre_c.reshape(BB, M, D),
                        preferred_element_type=f32) + a_nofc        # residual
    a_nofc2 = a_nofc.reshape(BB * M, D)

    # ---- output block: outFC(+folded BN) -> ReLU -> outLWA -> pooled output ----
    a = jnp.dot(a_nofc2.astype(cd), w_out_ref[...].astype(cd),
                preferred_element_type=f32) + sh2_ref[...]
    a = jnp.maximum(a, 0.0)                            # (BB*M, Ddk)
    a_c = a.astype(cd)
    score = jnp.dot(a_c, w_olwa_ref[...].astype(cd),
                    preferred_element_type=f32) + b_olwa_ref[...]
    alpha = _softmax_axis1(score.reshape(BB, M, C))    # (BB, M, C)
    if return_attn:
        attn2_ref[...] = alpha
    alpha_t = jnp.swapaxes(alpha * scale, 1, 2).astype(cd)          # (BB, C, M)
    out = jnp.einsum('bcm,bme->bce', alpha_t, a_c.reshape(BB, M, Ddk),
                     preferred_element_type=f32)                    # (BB, C, Ddk)
    out_ref[...] = out.astype(out_ref.dtype)           # one full-tile store


def _device_kind():
    try:
        return jax.devices()[0].device_kind.lower()
    except Exception:
        return ""


def dpla_forward(x, params, sequence_ids, enhance_factor=1.5, *,
                 batch_block=8, return_attn=False, use_bf16_matmul=True,
                 single_buffer_weights=False):
    """x: (B, S, D) float32.

    Returns (out (B, C, D*dk), [attn0, attn1, attn2]) when return_attn=True,
    else (out, []).  use_bf16_matmul casts MXU operands to bf16 (f32 accumulation
    kept) — recommended for production sizes on v5e/v6e/v7x; set False for f32.
    """
    B, S, D = x.shape
    M = params["w_in"].shape[1]
    Ddk = params["w_out"].shape[1]
    C = params["w_olwa"].shape[1]
    f32 = jnp.float32

    # The original module's enhance-mask broadcast ((B,S,1) vs (B,M,*)) only
    # works when seqLen == M; fail loudly instead of silently diverging.
    assert S == M, "Improved_DeepPseudoLabelwiseAttention requires seqLen == M"

    kind = _device_kind()
    is_v7 = ("v7" in kind) or ("tpu7" in kind)

    # ---- batch-block selection (generation aware) ----
    # v7x has 2 TensorCores: keep >=2 (preferably even) grid steps so both get
    # work under dimension_semantics=("parallel",). v5e/v6e have 1 TC: take the
    # largest divisor block (fewer ~0.35us per-step overheads, bigger matmuls).
    divisors = [d for d in range(1, B + 1) if B % d == 0]
    cands = [d for d in divisors if d <= batch_block] or [1]
    if is_v7 and B >= 2:
        two_step = [d for d in cands if B // d >= 2]
        cands = two_step or cands
        even = [d for d in cands if (B // d) % 2 == 0]
        cands = even or cands
    BB = max(cands)
    grid = (B // BB,)

    # ---- per-batch contains-sequence enhance scale (precomputed in wrapper) ----
    # TODO(synk): membership tests float equality of feature values against token
    # ids; the torch module uses its tokenizer's tkn2id table on raw token ids.
    contains = jnp.zeros((B,), bool)
    for sid in sequence_ids:
        contains = contains | jnp.any(x == f32(sid), axis=(1, 2))
    scale = (1.0 + contains.astype(f32) * (float(enhance_factor) - 1.0)).reshape(B, 1, 1)

    # ---- fold eval-mode BatchNorm (+ preceding FC bias) into weight / shift ----
    bn1_s = params["g1"] * lax.rsqrt(params["rv1"] + BN_EPS)          # (1, D)
    w_fc_f = params["w_fc"] * bn1_s                                    # (D, D)
    sh1 = (params["b_fc"] - params["rm1"]) * bn1_s + params["be1"]     # (1, D)
    bn2_s = params["g2"] * lax.rsqrt(params["rv2"] + BN_EPS)           # (1, Ddk)
    w_out_f = params["w_out"] * bn2_s                                  # (D, Ddk)
    sh2 = (params["b_out"] - params["rm2"]) * bn2_s + params["be2"]    # (1, Ddk)

    weights = [params["w_in"], params["b_in"],
               w_fc_f, sh1,
               params["w_lwa"], params["b_lwa"],
               w_out_f, sh2,
               params["w_olwa"], params["b_olwa"]]

    def batched(shape):
        return pl.BlockSpec((BB,) + shape, lambda g: (g,) + (0,) * len(shape))

    def shared(arr):
        shp = arr.shape
        if single_buffer_weights:
            # weights are grid-invariant: single-buffer to save 1x weight VMEM (v7x)
            return pl.BlockSpec(shp, lambda g: (0,) * len(shp),
                                pipeline_mode=pl.Buffered(1))
        return pl.BlockSpec(shp, lambda g: (0,) * len(shp))

    in_specs = [batched((S, D)), batched((1, 1))] + [shared(w) for w in weights]

    out_shape = [jax.ShapeDtypeStruct((B, C, Ddk), f32)]
    out_specs = [batched((C, Ddk))]
    if return_attn:
        # TODO(synk): attn maps have narrow last dims (masked stores); pack into a
        # lane-dense slab / bf16 if they are needed on the hot path at prod sizes.
        out_shape += [jax.ShapeDtypeStruct((B, S, M), f32),
                      jax.ShapeDtypeStruct((B, M, M), f32),
                      jax.ShapeDtypeStruct((B, M, C), f32)]
        out_specs += [batched((S, M)), batched((M, M)), batched((M, C))]

    # ---- generation-aware VMEM budget with headroom ----
    def nbytes(shape, dtype=f32):
        n = 1
        for d in shape:
            n *= int(d)
        return n * jnp.dtype(dtype).itemsize

    block_bytes = nbytes((BB, S, D)) + nbytes((BB, 1, 1)) + nbytes((BB, C, Ddk))
    if return_attn:
        block_bytes += nbytes((BB, S, M)) + nbytes((BB, M, M)) + nbytes((BB, M, C))
    weight_bytes = sum(nbytes(w.shape) for w in weights)
    interm_bytes = 6 * nbytes((BB * max(S, M), max(D, Ddk)))
    wbuf = 1 if single_buffer_weights else 2
    est = 2 * block_bytes + wbuf * weight_bytes + interm_bytes
    vmem_cap = (48 << 20) if is_v7 else (100 << 20)   # 64 MiB phys on v7x; 128 on v5e/v6e
    vmem_limit = int(min(vmem_cap, max(16 << 20, 3 * est)))
    # TODO(synk): for very large D/Ddk, tile w_out / w_olwa along Ddk with an
    # extra grid axis instead of loading them whole.

    # ---- cost estimate so XLA schedules/overlaps the custom call sensibly ----
    flops = 2 * B * (S * D * M + M * S * D
                     + M * D * D + M * D * M + M * M * D
                     + M * D * Ddk + M * Ddk * C + C * M * Ddk)
    transcendentals = B * (S * M + M * M + M * C)     # exps in the three softmaxes
    bytes_accessed = 4 * (int(x.size) + B + sum(int(w.size) for w in weights) + B * C * Ddk)
    if return_attn:
        bytes_accessed += 4 * B * (S * M + M * M + M * C)
    cost = pl.CostEstimate(flops=flops, transcendentals=transcendentals,
                           bytes_accessed=bytes_accessed)

    kernel = functools.partial(
        dpla_kernel,
        return_attn=return_attn,
        compute_dtype=jnp.bfloat16 if use_bf16_matmul else f32,
    )

    outs = pl.pallas_call(
        kernel,
        out_shape=tuple(out_shape),
        grid_spec=pltpu.PrefetchScalarGridSpec(
            num_scalar_prefetch=0,
            grid=grid,
            in_specs=in_specs,
            out_specs=tuple(out_specs),
        ),
        compiler_params=pltpu.CompilerParams(
            dimension_semantics=("parallel",),
            vmem_limit_bytes=vmem_limit),
        cost_estimate=cost,
    )(x, scale, *weights)

    if return_attn:
        out, a0, a1, a2 = outs
        return out, [a0, a1, a2]
    (out,) = outs
    return out, []


def dpla_reference(x, params, sequence_ids, enhance_factor=1.5):
    """Pure-JAX reference mirroring the PyTorch eval-mode forward."""
    B, S, D = x.shape
    contains = jnp.zeros((B,), bool)
    for sid in sequence_ids:
        contains = contains | jnp.any(x == jnp.float32(sid), axis=(1, 2))
    scale = 1.0 + contains.astype(jnp.float32)[:, None, None] * (enhance_factor - 1.0)

    sm = lambda s: jax.nn.softmax(s, axis=1)
    score = jnp.einsum('bsd,dm->bsm', x, params['w_in']) + params['b_in']
    alpha0 = sm(score)
    a_nofc = jnp.einsum('bsm,bsd->bmd', alpha0 * scale, x)
    a = jnp.einsum('bmd,de->bme', a_nofc, params['w_fc']) + params['b_fc']
    a = (a - params['rm1']) / jnp.sqrt(params['rv1'] + BN_EPS) * params['g1'] + params['be1']
    a_pre = jnp.maximum(a, 0.0)
    score = jnp.einsum('bmd,dk->bmk', a_pre, params['w_lwa']) + params['b_lwa']
    alpha1 = sm(score)
    a_nofc = jnp.einsum('brm,brd->bmd', alpha1 * scale, a_pre) + a_nofc
    a = jnp.einsum('bmd,de->bme', a_nofc, params['w_out']) + params['b_out']
    a = (a - params['rm2']) / jnp.sqrt(params['rv2'] + BN_EPS) * params['g2'] + params['be2']
    a = jnp.maximum(a, 0.0)
    score = jnp.einsum('bme,ec->bmc', a, params['w_olwa']) + params['b_olwa']
    alpha2 = sm(score)
    out = jnp.einsum('bmc,bme->bce', alpha2 * scale, a)
    return out, [alpha0, alpha1, alpha2]


def init_params(key, in_size, class_num, M, dk_enhance):
    """Deterministic synthetic parameters matching the module's __init__ shapes."""
    ks = jax.random.split(key, 20)
    n = iter(range(20))
    nrm = lambda shp: 0.1 * jax.random.normal(ks[next(n)], shp, dtype=jnp.float32)
    pos = lambda shp: 0.5 + jax.random.uniform(ks[next(n)], shp, dtype=jnp.float32)
    Ddk = in_size * dk_enhance
    return {
        # inLWA: Linear(inSize, M)
        "w_in": nrm((in_size, M)), "b_in": nrm((1, M)),
        # hdnFC: Linear(inSize, inSize); hdnBN: BatchNorm1d(inSize)
        "w_fc": nrm((in_size, in_size)), "b_fc": nrm((1, in_size)),
        "g1": pos((1, in_size)), "be1": nrm((1, in_size)),
        "rm1": nrm((1, in_size)), "rv1": pos((1, in_size)),
        # hdnLWA: Linear(inSize, M)
        "w_lwa": nrm((in_size, M)), "b_lwa": nrm((1, M)),
        # outFC: Linear(inSize, inSize*dkEnhance); outBN: BatchNorm1d(inSize*dkEnhance)
        "w_out": nrm((in_size, Ddk)), "b_out": nrm((1, Ddk)),
        "g2": pos((1, Ddk)), "be2": nrm((1, Ddk)),
        "rm2": nrm((1, Ddk)), "rv2": pos((1, Ddk)),
        # outLWA: Linear(inSize*dkEnhance, classNum)
        "w_olwa": nrm((Ddk, class_num)), "b_olwa": nrm((1, class_num)),
    }


if __name__ == "__main__":
    # Small shapes; the original module requires seqLen == M, so S == M.
    B, S, in_size, M, class_num, dk_enhance = 2, 8, 16, 8, 4, 4

    key = jax.random.PRNGKey(0)
    k_x, k_p = jax.random.split(key)
    x = jax.random.normal(k_x, (B, S, in_size), dtype=jnp.float32)
    # plant one token id so the contains-mask path is exercised for batch 0
    x = x.at[0, 0, 0].set(0.0)
    params = init_params(k_p, in_size, class_num, M, dk_enhance)

    # toy tokenizer: sequences=['TTT'] -> token id 0 (as the module would assign)
    sequence_ids = [0]

    # f32 operands here for a tight correctness check; use_bf16_matmul=True (the
    # default) is recommended for production on v5e/v6e/v7x (f32 accumulation).
    out, all_attn = dpla_forward(x, params, sequence_ids, enhance_factor=1.5,
                                 batch_block=8, return_attn=True,
                                 use_bf16_matmul=False)
    jax.block_until_ready(out)
    for a in all_attn:
        jax.block_until_ready(a)

    assert out.shape == (B, class_num, in_size * dk_enhance)
    assert all_attn[0].shape == (B, S, M)
    assert all_attn[1].shape == (B, M, M)
    assert all_attn[2].shape == (B, M, class_num)

    # loose-tolerance correctness check vs pure-JAX reference
    # (approx reciprocal in the softmax + folded BN introduce tiny differences)
    ref_out, ref_attn = dpla_reference(x, params, sequence_ids, 1.5)
    max_err = float(jnp.max(jnp.abs(out - ref_out)))
    ref_mag = float(jnp.max(jnp.abs(ref_out)))
    assert max_err <= 5e-2 * max(1.0, ref_mag), f"output mismatch: {max_err}"
    attn_err = float(jnp.max(jnp.abs(all_attn[0] - ref_attn[0])))
    assert attn_err <= 5e-2, f"attn mismatch: {attn_err}"

    print("KERNEL_OK")
</pallas_src>

<mosaic_0001>
module attributes {stable_mosaic.version = 11 : i64} {
  func.func @dpla_kernel(%arg0: i32, %arg1: memref<2x8x16xf32, #tpu.memory_space<vmem>>, %arg2: memref<2x1x1xf32, #tpu.memory_space<vmem>>, %arg3: memref<16x8xf32, #tpu.memory_space<vmem>>, %arg4: memref<1x8xf32, #tpu.memory_space<vmem>>, %arg5: memref<16x16xf32, #tpu.memory_space<vmem>>, %arg6: memref<1x16xf32, #tpu.memory_space<vmem>>, %arg7: memref<16x8xf32, #tpu.memory_space<vmem>>, %arg8: memref<1x8xf32, #tpu.memory_space<vmem>>, %arg9: memref<16x64xf32, #tpu.memory_space<vmem>>, %arg10: memref<1x64xf32, #tpu.memory_space<vmem>>, %arg11: memref<64x4xf32, #tpu.memory_space<vmem>>, %arg12: memref<1x4xf32, #tpu.memory_space<vmem>>, %arg13: memref<2x4x64xf32, #tpu.memory_space<vmem>>, %arg14: memref<2x8x8xf32, #tpu.memory_space<vmem>>, %arg15: memref<2x8x8xf32, #tpu.memory_space<vmem>>, %arg16: memref<2x8x4xf32, #tpu.memory_space<vmem>>) attributes {dimension_semantics = [#tpu.dimension_semantics<parallel>], iteration_bounds = array<i64: 1>, scalar_prefetch = 0 : i64, scratch_operands = 0 : i64, tpu.core_type = #tpu.core_type<tc>, window_params = [{transform_indices = @transform_0, window_bounds = array<i64: 2, 8, 16>}, {transform_indices = @transform_1, window_bounds = array<i64: 2, 1, 1>}, {pipeline_mode = #tpu.pipeline_mode<synchronous>, transform_indices = @transform_2, window_bounds = array<i64: 16, 8>}, {pipeline_mode = #tpu.pipeline_mode<synchronous>, transform_indices = @transform_3, window_bounds = array<i64: 1, 8>}, {pipeline_mode = #tpu.pipeline_mode<synchronous>, transform_indices = @transform_4, window_bounds = array<i64: 16, 16>}, {pipeline_mode = #tpu.pipeline_mode<synchronous>, transform_indices = @transform_5, window_bounds = array<i64: 1, 16>}, {pipeline_mode = #tpu.pipeline_mode<synchronous>, transform_indices = @transform_6, window_bounds = array<i64: 16, 8>}, {pipeline_mode = #tpu.pipeline_mode<synchronous>, transform_indices = @transform_7, window_bounds = array<i64: 1, 8>}, {pipeline_mode = #tpu.pipeline_mode<synchronous>, transform_indices = @transform_8, window_bounds = array<i64: 16, 64>}, {pipeline_mode = #tpu.pipeline_mode<synchronous>, transform_indices = @transform_9, window_bounds = array<i64: 1, 64>}, {pipeline_mode = #tpu.pipeline_mode<synchronous>, transform_indices = @transform_10, window_bounds = array<i64: 64, 4>}, {pipeline_mode = #tpu.pipeline_mode<synchronous>, transform_indices = @transform_11, window_bounds = array<i64: 1, 4>}, {transform_indices = @transform_12, window_bounds = array<i64: 2, 4, 64>}, {transform_indices = @transform_13, window_bounds = array<i64: 2, 8, 8>}, {transform_indices = @transform_14, window_bounds = array<i64: 2, 8, 8>}, {transform_indices = @transform_15, window_bounds = array<i64: 2, 8, 4>}]} {
    %c0 = arith.constant 0 : index
    %c0_0 = arith.constant 0 : index
    %c0_1 = arith.constant 0 : index
    %0 = vector.load %arg2[%c0, %c0_0, %c0_1] : memref<2x1x1xf32, #tpu.memory_space<vmem>>, vector<2x1x1xf32>
    %c0_2 = arith.constant 0 : index
    %c0_3 = arith.constant 0 : index
    %c0_4 = arith.constant 0 : index
    %1 = vector.load %arg1[%c0_2, %c0_3, %c0_4] : memref<2x8x16xf32, #tpu.memory_space<vmem>>, vector<2x8x16xf32>
    %2 = vector.shape_cast %1 : vector<2x8x16xf32> to vector<16x16xf32>
    %c0_5 = arith.constant 0 : index
    %c0_6 = arith.constant 0 : index
    %3 = vector.load %arg3[%c0_5, %c0_6] : memref<16x8xf32, #tpu.memory_space<vmem>>, vector<16x8xf32>
    %cst = arith.constant dense<0.000000e+00> : vector<16x8xf32>
    %4 = tpu.matmul %2, %3, %cst {dimension_numbers = #tpu.dot_dimension_numbers<[1], [0], [0], [1], [0, 0, 1, 1], [], []>} : vector<16x16xf32>, vector<16x8xf32>, vector<16x8xf32> -> vector<16x8xf32>
    %c0_7 = arith.constant 0 : index
    %c0_8 = arith.constant 0 : index
    %5 = vector.load %arg4[%c0_7, %c0_8] : memref<1x8xf32, #tpu.memory_space<vmem>>, vector<1x8xf32>
    %6 = vector.broadcast %5 : vector<1x8xf32> to vector<16x8xf32>
    %7 = arith.addf %4, %6 : vector<16x8xf32>
    %8 = vector.shape_cast %7 : vector<16x8xf32> to vector<2x8x8xf32>
    %cst_9 = arith.constant dense<0xFF800000> : vector<2x8xf32>
    %9 = vector.multi_reduction <maximumf>, %8, %cst_9 [1] : vector<2x8x8xf32> to vector<2x8xf32>
    %10 = vector.shape_cast %9 : vector<2x8xf32> to vector<2x1x8xf32>
    %11 = vector.broadcast %10 : vector<2x1x8xf32> to vector<2x8x8xf32>
    %12 = arith.subf %8, %11 : vector<2x8x8xf32>
    %13 = math.exp %12 : vector<2x8x8xf32>
    %cst_10 = arith.constant dense<0.000000e+00> : vector<2x8xf32>
    %14 = vector.multi_reduction <add>, %13, %cst_10 [1] : vector<2x8x8xf32> to vector<2x8xf32>
    %15 = vector.shape_cast %14 : vector<2x8xf32> to vector<2x1x8xf32>
    %16 = tpu.reciprocal %15 {approx = true} : vector<2x1x8xf32> -> vector<2x1x8xf32>
    %17 = vector.broadcast %16 : vector<2x1x8xf32> to vector<2x8x8xf32>
    %18 = arith.mulf %13, %17 : vector<2x8x8xf32>
    %c0_11 = arith.constant 0 : index
    %c0_12 = arith.constant 0 : index
    %c0_13 = arith.constant 0 : index
    %19 = vector.load %arg14[%c0_11, %c0_12, %c0_13] : memref<2x8x8xf32, #tpu.memory_space<vmem>>, vector<2x8x8xf32>
    tpu.vector_store %arg14[%c0_11, %c0_12, %c0_13], %18 {strides = array<i32>} : memref<2x8x8xf32, #tpu.memory_space<vmem>>, vector<2x8x8xf32>,
    %20 = vector.broadcast %0 : vector<2x1x1xf32> to vector<2x8x8xf32>
    %21 = arith.mulf %18, %20 : vector<2x8x8xf32>
    %22 = tpu.transpose %21, [0, 2, 1] : vector<2x8x8xf32> -> vector<2x8x8xf32>
    "tpu.trace_start"() <{level = 10 : i32, message = "bms,bsd->bmd"}> : () -> ()
    %cst_14 = arith.constant dense<0.000000e+00> : vector<2x8x16xf32>
    %23 = tpu.matmul %22, %1, %cst_14 {dimension_numbers = #tpu.dot_dimension_numbers<[2], [1], [1], [2], [0, 0, 0, 1, 1, 2], [0], [0]>} : vector<2x8x8xf32>, vector<2x8x16xf32>, vector<2x8x16xf32> -> vector<2x8x16xf32>
    "tpu.trace_stop"() : () -> ()
    %24 = vector.shape_cast %23 : vector<2x8x16xf32> to vector<16x16xf32>
    %c0_15 = arith.constant 0 : index
    %c0_16 = arith.constant 0 : index
    %25 = vector.load %arg5[%c0_15, %c0_16] : memref<16x16xf32, #tpu.memory_space<vmem>>, vector<16x16xf32>
    %cst_17 = arith.constant dense<0.000000e+00> : vector<16x16xf32>
    %26 = tpu.matmul %24, %25, %cst_17 {dimension_numbers = #tpu.dot_dimension_numbers<[1], [0], [0], [1], [0, 0, 1, 1], [], []>} : vector<16x16xf32>, vector<16x16xf32>, vector<16x16xf32> -> vector<16x16xf32>
    %c0_18 = arith.constant 0 : index
    %c0_19 = arith.constant 0 : index
    %27 = vector.load %arg6[%c0_18, %c0_19] : memref<1x16xf32, #tpu.memory_space<vmem>>, vector<1x16xf32>
    %28 = vector.broadcast %27 : vector<1x16xf32> to vector<16x16xf32>
    %29 = arith.addf %26, %28 : vector<16x16xf32>
    %cst_20 = arith.constant 0.000000e+00 : f32
    %30 = vector.broadcast %cst_20 : f32 to vector<16x16xf32>
    %31 = arith.maximumf %29, %30 : vector<16x16xf32>
    %c0_21 = arith.constant 0 : index
    %c0_22 = arith.constant 0 : index
    %32 = vector.load %arg7[%c0_21, %c0_22] : memref<16x8xf32, #tpu.memory_space<vmem>>, vector<16x8xf32>
    %cst_23 = arith.constant dense<0.000000e+00> : vector<16x8xf32>
    %33 = tpu.matmul %31, %32, %cst_23 {dimension_numbers = #tpu.dot_dimension_numbers<[1], [0], [0], [1], [0, 0, 1, 1], [], []>} : vector<16x16xf32>, vector<16x8xf32>, vector<16x8xf32> -> vector<16x8xf32>
    %c0_24 = arith.constant 0 : index
    %c0_25 = arith.constant 0 : index
    %34 = vector.load %arg8[%c0_24, %c0_25] : memref<1x8xf32, #tpu.memory_space<vmem>>, vector<1x8xf32>
    %35 = vector.broadcast %34 : vector<1x8xf32> to vector<16x8xf32>
    %36 = arith.addf %33, %35 : vector<16x8xf32>
    %37 = vector.shape_cast %36 : vector<16x8xf32> to vector<2x8x8xf32>
    %cst_26 = arith.constant dense<0xFF800000> : vector<2x8xf32>
    %38 = vector.multi_reduction <maximumf>, %37, %cst_26 [1] : vector<2x8x8xf32> to vector<2x8xf32>
    %39 = vector.shape_cast %38 : vector<2x8xf32> to vector<2x1x8xf32>
    %40 = vector.broadcast %39 : vector<2x1x8xf32> to vector<2x8x8xf32>
    %41 = arith.subf %37, %40 : vector<2x8x8xf32>
    %42 = math.exp %41 : vector<2x8x8xf32>
    %cst_27 = arith.constant dense<0.000000e+00> : vector<2x8xf32>
    %43 = vector.multi_reduction <add>, %42, %cst_27 [1] : vector<2x8x8xf32> to vector<2x8xf32>
    %44 = vector.shape_cast %43 : vector<2x8xf32> to vector<2x1x8xf32>
    %45 = tpu.reciprocal %44 {approx = true} : vector<2x1x8xf32> -> vector<2x1x8xf32>
    %46 = vector.broadcast %45 : vector<2x1x8xf32> to vector<2x8x8xf32>
    %47 = arith.mulf %42, %46 : vector<2x8x8xf32>
    %c0_28 = arith.constant 0 : index
    %c0_29 = arith.constant 0 : index
    %c0_30 = arith.constant 0 : index
    %48 = vector.load %arg15[%c0_28, %c0_29, %c0_30] : memref<2x8x8xf32, #tpu.memory_space<vmem>>, vector<2x8x8xf32>
    tpu.vector_store %arg15[%c0_28, %c0_29, %c0_30], %47 {strides = array<i32>} : memref<2x8x8xf32, #tpu.memory_space<vmem>>, vector<2x8x8xf32>,
    %49 = vector.broadcast %0 : vector<2x1x1xf32> to vector<2x8x8xf32>
    %50 = arith.mulf %47, %49 : vector<2x8x8xf32>
    %51 = tpu.transpose %50, [0, 2, 1] : vector<2x8x8xf32> -> vector<2x8x8xf32>
    %52 = vector.shape_cast %31 : vector<16x16xf32> to vector<2x8x16xf32>
    "tpu.trace_start"() <{level = 10 : i32, message = "bmr,brd->bmd"}> : () -> ()
    %cst_31 = arith.constant dense<0.000000e+00> : vector<2x8x16xf32>
    %53 = tpu.matmul %51, %52, %cst_31 {dimension_numbers = #tpu.dot_dimension_numbers<[2], [1], [1], [2], [0, 0, 0, 1, 1, 2], [0], [0]>} : vector<2x8x8xf32>, vector<2x8x16xf32>, vector<2x8x16xf32> -> vector<2x8x16xf32>
    "tpu.trace_stop"() : () -> ()
    %54 = arith.addf %53, %23 : vector<2x8x16xf32>
    %55 = vector.shape_cast %54 : vector<2x8x16xf32> to vector<16x16xf32>
    %c0_32 = arith.constant 0 : index
    %c0_33 = arith.constant 0 : index
    %56 = vector.load %arg9[%c0_32, %c0_33] : memref<16x64xf32, #tpu.memory_space<vmem>>, vector<16x64xf32>
    %cst_34 = arith.constant dense<0.000000e+00> : vector<16x64xf32>
    %57 = tpu.matmul %55, %56, %cst_34 {dimension_numbers = #tpu.dot_dimension_numbers<[1], [0], [0], [1], [0, 0, 1, 1], [], []>} : vector<16x16xf32>, vector<16x64xf32>, vector<16x64xf32> -> vector<16x64xf32>
    %c0_35 = arith.constant 0 : index
    %c0_36 = arith.constant 0 : index
    %58 = vector.load %arg10[%c0_35, %c0_36] : memref<1x64xf32, #tpu.memory_space<vmem>>, vector<1x64xf32>
    %59 = vector.broadcast %58 : vector<1x64xf32> to vector<16x64xf32>
    %60 = arith.addf %57, %59 : vector<16x64xf32>
    %cst_37 = arith.constant 0.000000e+00 : f32
    %61 = vector.broadcast %cst_37 : f32 to vector<16x64xf32>
    %62 = arith.maximumf %60, %61 : vector<16x64xf32>
    %c0_38 = arith.constant 0 : index
    %c0_39 = arith.constant 0 : index
    %63 = vector.load %arg11[%c0_38, %c0_39] : memref<64x4xf32, #tpu.memory_space<vmem>>, vector<64x4xf32>
    %cst_40 = arith.constant dense<0.000000e+00> : vector<16x4xf32>
    %64 = tpu.matmul %62, %63, %cst_40 {dimension_numbers = #tpu.dot_dimension_numbers<[1], [0], [0], [1], [0, 0, 1, 1], [], []>} : vector<16x64xf32>, vector<64x4xf32>, vector<16x4xf32> -> vector<16x4xf32>
    %c0_41 = arith.constant 0 : index
    %c0_42 = arith.constant 0 : index
    %65 = vector.load %arg12[%c0_41, %c0_42] : memref<1x4xf32, #tpu.memory_space<vmem>>, vector<1x4xf32>
    %66 = vector.broadcast %65 : vector<1x4xf32> to vector<16x4xf32>
    %67 = arith.addf %64, %66 : vector<16x4xf32>
    %68 = vector.shape_cast %67 : vector<16x4xf32> to vector<2x8x4xf32>
    %cst_43 = arith.constant dense<0xFF800000> : vector<2x4xf32>
    %69 = vector.multi_reduction <maximumf>, %68, %cst_43 [1] : vector<2x8x4xf32> to vector<2x4xf32>
    %70 = vector.shape_cast %69 : vector<2x4xf32> to vector<2x1x4xf32>
    %71 = vector.broadcast %70 : vector<2x1x4xf32> to vector<2x8x4xf32>
    %72 = arith.subf %68, %71 : vector<2x8x4xf32>
    %73 = math.exp %72 : vector<2x8x4xf32>
    %cst_44 = arith.constant dense<0.000000e+00> : vector<2x4xf32>
    %74 = vector.multi_reduction <add>, %73, %cst_44 [1] : vector<2x8x4xf32> to vector<2x4xf32>
    %75 = vector.shape_cast %74 : vector<2x4xf32> to vector<2x1x4xf32>
    %76 = tpu.reciprocal %75 {approx = true} : vector<2x1x4xf32> -> vector<2x1x4xf32>
    %77 = vector.broadcast %76 : vector<2x1x4xf32> to vector<2x8x4xf32>
    %78 = arith.mulf %73, %77 : vector<2x8x4xf32>
    %c0_45 = arith.constant 0 : index
    %c0_46 = arith.constant 0 : index
    %c0_47 = arith.constant 0 : index
    %79 = vector.load %arg16[%c0_45, %c0_46, %c0_47] : memref<2x8x4xf32, #tpu.memory_space<vmem>>, vector<2x8x4xf32>
    tpu.vector_store %arg16[%c0_45, %c0_46, %c0_47], %78 {strides = array<i32>} : memref<2x8x4xf32, #tpu.memory_space<vmem>>, vector<2x8x4xf32>,
    %80 = vector.broadcast %0 : vector<2x1x1xf32> to vector<2x8x4xf32>
    %81 = arith.mulf %78, %80 : vector<2x8x4xf32>
    %82 = tpu.transpose %81, [0, 2, 1] : vector<2x8x4xf32> -> vector<2x4x8xf32>
    %83 = vector.shape_cast %62 : vector<16x64xf32> to vector<2x8x64xf32>
    "tpu.trace_start"() <{level = 10 : i32, message = "bcm,bme->bce"}> : () -> ()
    %cst_48 = arith.constant dense<0.000000e+00> : vector<2x4x64xf32>
    %84 = tpu.matmul %82, %83, %cst_48 {dimension_numbers = #tpu.dot_dimension_numbers<[2], [1], [1], [2], [0, 0, 0, 1, 1, 2], [0], [0]>} : vector<2x4x8xf32>, vector<2x8x64xf32>, vector<2x4x64xf32> -> vector<2x4x64xf32>
    "tpu.trace_stop"() : () -> ()
    %c0_49 = arith.constant 0 : index
    %c0_50 = arith.constant 0 : index
    %c0_51 = arith.constant 0 : index
    %85 = vector.load %arg13[%c0_49, %c0_50, %c0_51] : memref<2x4x64xf32, #tpu.memory_space<vmem>>, vector<2x4x64xf32>
    tpu.vector_store %arg13[%c0_49, %c0_50, %c0_51], %84 {strides = array<i32>} : memref<2x4x64xf32, #tpu.memory_space<vmem>>, vector<2x4x64xf32>,
    return
  }
  func.func @transform_0(%arg0: i32) -> (i32, i32, i32) {
    %c0_i32 = arith.constant 0 : i32
    %c0_i32_0 = arith.constant 0 : i32
    %c0_i32_1 = arith.constant 0 : i32
    return %arg0, %c0_i32, %c0_i32_0 : i32, i32, i32
  }
  func.func @transform_1(%arg0: i32) -> (i32, i32, i32) {
    %c0_i32 = arith.constant 0 : i32
    %c0_i32_0 = arith.constant 0 : i32
    %c0_i32_1 = arith.constant 0 : i32
    return %arg0, %c0_i32, %c0_i32_0 : i32, i32, i32
  }
  func.func @transform_2(%arg0: i32) -> (i32, i32) {
    %c0_i32 = arith.constant 0 : i32
    %c0_i32_0 = arith.constant 0 : i32
    %c0_i32_1 = arith.constant 0 : i32
    return %c0_i32, %c0_i32_0 : i32, i32
  }
  func.func @transform_3(%arg0: i32) -> (i32, i32) {
    %c0_i32 = arith.constant 0 : i32
    %c0_i32_0 = arith.constant 0 : i32
    %c0_i32_1 = arith.constant 0 : i32
    return %c0_i32, %c0_i32_0 : i32, i32
  }
  func.func @transform_4(%arg0: i32) -> (i32, i32) {
    %c0_i32 = arith.constant 0 : i32
    %c0_i32_0 = arith.constant 0 : i32
    %c0_i32_1 = arith.constant 0 : i32
    return %c0_i32, %c0_i32_0 : i32, i32
  }
  func.func @transform_5(%arg0: i32) -> (i32, i32) {
    %c0_i32 = arith.constant 0 : i32
    %c0_i32_0 = arith.constant 0 : i32
    %c0_i32_1 = arith.constant 0 : i32
    return %c0_i32, %c0_i32_0 : i32, i32
  }
  func.func @transform_6(%arg0: i32) -> (i32, i32) {
    %c0_i32 = arith.constant 0 : i32
    %c0_i32_0 = arith.constant 0 : i32
    %c0_i32_1 = arith.constant 0 : i32
    return %c0_i32, %c0_i32_0 : i32, i32
  }
  func.func @transform_7(%arg0: i32) -> (i32, i32) {
    %c0_i32 = arith.constant 0 : i32
    %c0_i32_0 = arith.constant 0 : i32
    %c0_i32_1 = arith.constant 0 : i32
    return %c0_i32, %c0_i32_0 : i32, i32
  }
  func.func @transform_8(%arg0: i32) -> (i32, i32) {
    %c0_i32 = arith.constant 0 : i32
    %c0_i32_0 = arith.constant 0 : i32
    %c0_i32_1 = arith.constant 0 : i32
    return %c0_i32, %c0_i32_0 : i32, i32
  }
  func.func @transform_9(%arg0: i32) -> (i32, i32) {
    %c0_i32 = arith.constant 0 : i32
    %c0_i32_0 = arith.constant 0 : i32
    %c0_i32_1 = arith.constant 0 : i32
    return %c0_i32, %c0_i32_0 : i32, i32
  }
  func.func @transform_10(%arg0: i32) -> (i32, i32) {
    %c0_i32 = arith.constant 0 : i32
    %c0_i32_0 = arith.constant 0 : i32
    %c0_i32_1 = arith.constant 0 : i32
    return %c0_i32, %c0_i32_0 : i32, i32
  }
  func.func @transform_11(%arg0: i32) -> (i32, i32) {
    %c0_i32 = arith.constant 0 : i32
    %c0_i32_0 = arith.constant 0 : i32
    %c0_i32_1 = arith.constant 0 : i32
    return %c0_i32, %c0_i32_0 : i32, i32
  }
  func.func @transform_12(%arg0: i32) -> (i32, i32, i32) {
    %c0_i32 = arith.constant 0 : i32
    %c0_i32_0 = arith.constant 0 : i32
    %c0_i32_1 = arith.constant 0 : i32
    return %arg0, %c0_i32, %c0_i32_0 : i32, i32, i32
  }
  func.func @transform_13(%arg0: i32) -> (i32, i32, i32) {
    %c0_i32 = arith.constant 0 : i32
    %c0_i32_0 = arith.constant 0 : i32
    %c0_i32_1 = arith.constant 0 : i32
    return %arg0, %c0_i32, %c0_i32_0 : i32, i32, i32
  }
  func.func @transform_14(%arg0: i32) -> (i32, i32, i32) {
    %c0_i32 = arith.constant 0 : i32
    %c0_i32_0 = arith.constant 0 : i32
    %c0_i32_1 = arith.constant 0 : i32
    return %arg0, %c0_i32, %c0_i32_0 : i32, i32, i32
  }
  func.func @transform_15(%arg0: i32) -> (i32, i32, i32) {
    %c0_i32 = arith.constant 0 : i32
    %c0_i32_0 = arith.constant 0 : i32
    %c0_i32_1 = arith.constant 0 : i32
    return %arg0, %c0_i32, %c0_i32_0 : i32, i32, i32
  }
}

</mosaic_0001>

<llo_original>
// kernel: tpu_custom_call.1
$region0: #{tpu_custom_call.1}
  #allocation0 [shape = 'u32[]', space=smem, size = 0x4, offset = 0x4, fixed_abs, tag = 'smem constant byte address 0x4 - core index']
  #allocation1 [shape = 'u32[72,128]{1,0:T(1,128)}', space=vmem, size = 0x9000, scoped, tag = 'internal scratch']
  %s0 = inlined_call_operand.vmem [shape: f32[2,8,16], index: 0, kind: input, shape index: {}]
  %s1 = inlined_call_operand.vmem [shape: f32[2,1,1], index: 1, kind: input, shape index: {}]
  %s2 = inlined_call_operand.vmem [shape: f32[16,8], index: 2, kind: input, shape index: {}]
  %s3 = inlined_call_operand.vmem [shape: f32[1,8], index: 3, kind: input, shape index: {}]
  %s4 = inlined_call_operand.vmem [shape: f32[16,16], index: 4, kind: input, shape index: {}]
  %s5 = inlined_call_operand.vmem [shape: f32[1,16], index: 5, kind: input, shape index: {}]
  %s6 = inlined_call_operand.vmem [shape: f32[16,8], index: 6, kind: input, shape index: {}]
  %s7 = inlined_call_operand.vmem [shape: f32[1,8], index: 7, kind: input, shape index: {}]
  %s8 = inlined_call_operand.vmem [shape: f32[16,64], index: 8, kind: input, shape index: {}]
  %s9 = inlined_call_operand.vmem [shape: f32[1,64], index: 9, kind: input, shape index: {}]
  %s10 = inlined_call_operand.vmem [shape: f32[64,4], index: 10, kind: input, shape index: {}]
  %s11 = inlined_call_operand.vmem [shape: f32[1,4], index: 11, kind: input, shape index: {}]
  %s12 = inlined_call_operand.hbm [shape: f32[2,4,64], index: 12, kind: output, shape index: {0}]
  %s13 = inlined_call_operand.hbm [shape: f32[2,8,8], index: 13, kind: output, shape index: {1}]
  %s14 = inlined_call_operand.hbm [shape: f32[2,8,8], index: 14, kind: output, shape index: {2}]
  %s15 = inlined_call_operand.vmem [shape: f32[2,8,4], index: 15, kind: output, shape index: {3}]
  %16 = xla_tuple %s12, %s13, %s14, %s15
  %s17 = sld [smem:[#allocation0]]
  $region82: #{tpu_custom_call.1} parent=0
    _
  %s19 = ssub.s32 1, %s17
  %s20 = scalar_select 0, %s19, %s17
  $region1: #{tpu_custom_call.1} parent=0
    #allocation2 [shape = 'u8[4096]{0}', space=vmem, size = 0x1000, scoped, tag = 'output window, operand 0, single buffered']
    #allocation3 [shape = 's32[1]{0}', space=sflag, size = 0x4, scoped, tag = 'scoped memory for tpu_custom_call.1']
    #allocation4 [shape = 'u8[8192]{0}', space=vmem, size = 0x2000, scoped, tag = 'output window, operand 1, single buffered']
    #allocation5 [shape = 's32[1]{0}', space=sflag, size = 0x4, scoped, tag = 'scoped memory for tpu_custom_call.1']
    #allocation6 [shape = 'u8[8192]{0}', space=vmem, size = 0x2000, scoped, tag = 'output window, operand 2, single buffered']
    %21 = vsyncpa [#allocation3], 0
    %22 = vsyncpa [#allocation5], 0
    // Predicated region
    $region2: #{tpu_custom_call.1} parent=1 // pred_check
      _
    $region3: #{tpu_custom_call.1} parent=1 // pred_check_branch
      %24 = sbr.rel (0) target = $region5
    $region4: #{tpu_custom_call.1} parent=1 // pred_region
      _
    $region5: #{tpu_custom_call.1} parent=1 // pred_fallthru
      _
    // Predicated region
    $region6: #{tpu_custom_call.1} parent=1 // pred_check
      _
    $region7: #{tpu_custom_call.1} parent=1 // pred_check_branch
      %26 = sbr.rel (0) target = $region9
    $region8: #{tpu_custom_call.1} parent=1 // pred_region
      _
    $region9: #{tpu_custom_call.1} parent=1 // pred_fallthru
      _
    // Predicated region
    $region10: #{tpu_custom_call.1} parent=1 // pred_check
      _
    $region11: #{tpu_custom_call.1} parent=1 // pred_check_branch
      %28 = sbr.rel (0) target = $region13
    $region12: #{tpu_custom_call.1} parent=1 // pred_region
      _
    $region13: #{tpu_custom_call.1} parent=1 // pred_fallthru
      _
    // Predicated region
    $region14: #{tpu_custom_call.1} parent=1 // pred_check
      _
    $region15: #{tpu_custom_call.1} parent=1 // pred_check_branch
      %30 = sbr.rel (0) target = $region17
    $region16: #{tpu_custom_call.1} parent=1 // pred_region
      _
    $region17: #{tpu_custom_call.1} parent=1 // pred_fallthru
      _
    // Predicated region
    $region18: #{tpu_custom_call.1} parent=1 // pred_check
      _
    $region19: #{tpu_custom_call.1} parent=1 // pred_check_branch
      %32 = sbr.rel (0) target = $region21
    $region20: #{tpu_custom_call.1} parent=1 // pred_region
      _
    $region21: #{tpu_custom_call.1} parent=1 // pred_fallthru
      _
    // Predicated region
    $region22: #{tpu_custom_call.1} parent=1 // pred_check
      _
    $region23: #{tpu_custom_call.1} parent=1 // pred_check_branch
      %34 = sbr.rel (0) target = $region25
    $region24: #{tpu_custom_call.1} parent=1 // pred_region
      _
    $region25: #{tpu_custom_call.1} parent=1 // pred_fallthru
      _
    // Predicated region
    $region26: #{tpu_custom_call.1} parent=1 // pred_check
      _
    $region27: #{tpu_custom_call.1} parent=1 // pred_check_branch
      %36 = sbr.rel (0) target = $region29
    $region28: #{tpu_custom_call.1} parent=1 // pred_region
      _
    $region29: #{tpu_custom_call.1} parent=1 // pred_fallthru
      _
    // Predicated region
    $region30: #{tpu_custom_call.1} parent=1 // pred_check
      _
    $region31: #{tpu_custom_call.1} parent=1 // pred_check_branch
      %38 = sbr.rel (0) target = $region33
    $region32: #{tpu_custom_call.1} parent=1 // pred_region
      _
    $region33: #{tpu_custom_call.1} parent=1 // pred_fallthru
      _
    // Predicated region
    $region34: #{tpu_custom_call.1} parent=1 // pred_check
      _
    $region35: #{tpu_custom_call.1} parent=1 // pred_check_branch
      %40 = sbr.rel (0) target = $region37
    $region36: #{tpu_custom_call.1} parent=1 // pred_region
      _
    $region37: #{tpu_custom_call.1} parent=1 // pred_fallthru
      _
    // Predicated region
    $region38: #{tpu_custom_call.1} parent=1 // pred_check
      _
    $region39: #{tpu_custom_call.1} parent=1 // pred_check_branch
      %42 = sbr.rel (0) target = $region41
    $region40: #{tpu_custom_call.1} parent=1 // pred_region
      _
    $region41: #{tpu_custom_call.1} parent=1 // pred_fallthru
      _
    // Predicated region
    $region42: #{tpu_custom_call.1} parent=1 // pred_check
      _
    $region43: #{tpu_custom_call.1} parent=1 // pred_check_branch
      %44 = sbr.rel (0) target = $region45
    $region44: #{tpu_custom_call.1} parent=1 // pred_region
      _
    $region45: #{tpu_custom_call.1} parent=1 // pred_fallthru
      _
    // Predicated region
    $region46: #{tpu_custom_call.1} parent=1 // pred_check
      _
    $region47: #{tpu_custom_call.1} parent=1 // pred_check_branch
      %46 = sbr.rel (0) target = $region49
    $region48: #{tpu_custom_call.1} parent=1 // pred_region
      _
    $region49: #{tpu_custom_call.1} parent=1 // pred_fallthru
      _
    %v47 = vld [vmem:[%s1] sm:$0x1]
    %v48 = vld [vmem:[%s1 + $0x1] sm:$0x1]
    %v49 = vld [vmem:[%s0] sm:$0xff]
    %v50 = vld [vmem:[%s0 + $0x8] sm:$0xff]
    %v51 = vld [vmem:[%s2] sm:$0xff]
    %v52 = vld [vmem:[%s2 + $0x8] sm:$0xff]
    %v53 = vld [vmem:[%s3] sm:$0x1]
    %v55 = vperm.slane %v53, 0
    %vm57 = vcmask 130048
    %v59 = vsel %vm57, %v49, 0
    %v62 = vsel %vm57, %v50, 0
    %64 = vmatpush.msra.mxu0 0.0
    %65 = vmatpush.msra.mxu0 0.0
    %66 = vmatpush.msra.mxu0 0.0
    %67 = vmatpush.msra.mxu0 0.0
    %68 = vmatpush.msra.mxu0 0.0
    %69 = vmatpush.msra.mxu0 0.0
    %70 = vmatpush.msra.mxu0 0.0
    %71 = vmatpush.msra.mxu0 0.0
    %72 = vmatpush.msra.mxu0 0.0
    %73 = vmatpush.msra.mxu0 0.0
    %74 = vmatpush.msra.mxu0 0.0
    %75 = vmatpush.msra.mxu0 0.0
    %76 = vmatpush.msra.mxu0 0.0
    %77 = vmatpush.msra.mxu0 0.0
    %78 = vmatpush.msra.mxu0 %v52
    %79 = vmatpush.msra.mxu0 %v51
    %80 = vmatmul.f32.gmra.mxu0 %v59
    %v81 = vpop.f32.mrf.mxu0
    %v82 = vadd.f32 %v55, %v81
    %83 = vmatmul.f32.gmra.mxu0 %v62
    %v84 = vpop.f32.mrf.mxu0
    %v85 = vadd.f32 %v55, %v84
    %86 = vdwg.mxu0
    %vm87 = vcmask 64512
    %v88 = vsel %vm87, %v82, -inf
    %v89 = vrot.slane %v88, 4
    %v90 = vmax.f32 %v88, %v89
    %v91 = vrot.slane %v90, 2
    %v92 = vmax.f32 %v90, %v91
    %v93 = vrot.slane %v92, 1
    %v94 = vmax.f32 %v92, %v93
    %v95 = vsel %vm87, %v85, -inf
    %v96 = vrot.slane %v95, 4
    %v97 = vmax.f32 %v95, %v96
    %v98 = vrot.slane %v97, 2
    %v99 = vmax.f32 %v97, %v98
    %v100 = vrot.slane %v99, 1
    %v101 = vmax.f32 %v99, %v100
    %v102 = vsub.f32 %v82, %v94
    %v103 = vsub.f32 %v85, %v101
    %v104 = vmul.f32 %v102, 1.442695
    %v105 = vpow.pop %v104
    %v106 = vmul.f32 %v103, 1.442695
    %v107 = vpow.pop %v106
    %v108 = vsel %vm87, %v105, 0.0
    %v109 = vrot.slane %v108, 4
    %v110 = vadd.f32 %v108, %v109
    %v111 = vrot.slane %v110, 2
    %v112 = vadd.f32 %v110, %v111
    %v113 = vrot.slane %v112, 1
    %v114 = vadd.f32 %v112, %v113
    %v115 = vsel %vm87, %v107, 0.0
    %v116 = vrot.slane %v115, 4
    %v117 = vadd.f32 %v115, %v116
    %v118 = vrot.slane %v117, 2
    %v119 = vadd.f32 %v117, %v118
    %v120 = vrot.slane %v119, 1
    %v121 = vadd.f32 %v119, %v120
    %v122 = vrcp.pop %v114
    %v123 = vrcp.pop %v121
    %v124 = vmul.f32 %v105, %v122
    %v125 = vmul.f32 %v107, %v123
    %126 = vst.msk [vmem:[#allocation4] sm:$0xff] %vm87, %v124
    %127 = vst.msk [vmem:[#allocation4 + $0x8] sm:$0xff] %vm87, %v125
    %v130 = vperm.slane %v47, 0
    %v131 = vperm.slane %v48, 0
    %132 = vset.pattern.permute.xlu0 0
    %133 = vperm.xlu0 %132, %v130
    %v134 = vpop.permute.xlu0 %133
    %136 = vset.pattern.permute.xlu0 0
    %137 = vperm.xlu0 %136, %v131
    %v138 = vpop.permute.xlu0 %137
    %v140 = vmul.f32 %v124, %v134
    %v141 = vmul.f32 %v125, %v138
    %142 = vxpose.xlu0.b32.start [1/16] %v140, 128
    %143 = vxpose.xlu0.b32.cont [2/16] 0.0, 128
    %144 = vxpose.xlu0.b32.cont [3/16] 0.0, 128
    %145 = vxpose.xlu0.b32.cont [4/16] 0.0, 128
    %146 = vxpose.xlu0.b32.cont [5/16] 0.0, 128
    %147 = vxpose.xlu0.b32.cont [6/16] 0.0, 128
    %148 = vxpose.xlu0.b32.cont [7/16] 0.0, 128
    %149 = vxpose.xlu0.b32.cont [8/16] 0.0, 128
    %150 = vxpose.xlu0.b32.cont [9/16] 0.0, 128
    %151 = vxpose.xlu0.b32.cont [10/16] 0.0, 128
    %152 = vxpose.xlu0.b32.cont [11/16] 0.0, 128
    %153 = vxpose.xlu0.b32.cont [12/16] 0.0, 128
    %154 = vxpose.xlu0.b32.cont [13/16] 0.0, 128
    %155 = vxpose.xlu0.b32.cont [14/16] 0.0, 128
    %156 = vxpose.xlu0.b32.cont [15/16] 0.0, 128
    %157 = vxpose.xlu0.b32.end [16/16] 0.0, 128
    %v158 = vpop.trf.xlu0
    %v159 = vpop.trf.xlu0
    %v160 = vpop.trf.xlu0
    %v161 = vpop.trf.xlu0
    %v162 = vpop.trf.xlu0
    %v163 = vpop.trf.xlu0
    %v164 = vpop.trf.xlu0
    %v165 = vpop.trf.xlu0
    %v166 = vpop.trf.xlu0
    %v167 = vpop.trf.xlu0
    %v168 = vpop.trf.xlu0
    %v169 = vpop.trf.xlu0
    %v170 = vpop.trf.xlu0
    %v171 = vpop.trf.xlu0
    %v172 = vpop.trf.xlu0
    %v173 = vpop.trf.xlu0
    %174 = vxpose.xlu0.b32.start [1/16] %v141, 128
    %175 = vxpose.xlu0.b32.cont [2/16] 0.0, 128
    %176 = vxpose.xlu0.b32.cont [3/16] 0.0, 128
    %177 = vxpose.xlu0.b32.cont [4/16] 0.0, 128
    %178 = vxpose.xlu0.b32.cont [5/16] 0.0, 128
    %179 = vxpose.xlu0.b32.cont [6/16] 0.0, 128
    %180 = vxpose.xlu0.b32.cont [7/16] 0.0, 128
    %181 = vxpose.xlu0.b32.cont [8/16] 0.0, 128
    %182 = vxpose.xlu0.b32.cont [9/16] 0.0, 128
    %183 = vxpose.xlu0.b32.cont [10/16] 0.0, 128
    %184 = vxpose.xlu0.b32.cont [11/16] 0.0, 128
    %185 = vxpose.xlu0.b32.cont [12/16] 0.0, 128
    %186 = vxpose.xlu0.b32.cont [13/16] 0.0, 128
    %187 = vxpose.xlu0.b32.cont [14/16] 0.0, 128
    %188 = vxpose.xlu0.b32.cont [15/16] 0.0, 128
    %189 = vxpose.xlu0.b32.end [16/16] 0.0, 128
    %v190 = vpop.trf.xlu0
    %v191 = vpop.trf.xlu0
    %v192 = vpop.trf.xlu0
    %v193 = vpop.trf.xlu0
    %v194 = vpop.trf.xlu0
    %v195 = vpop.trf.xlu0
    %v196 = vpop.trf.xlu0
    %v197 = vpop.trf.xlu0
    %v198 = vpop.trf.xlu0
    %v199 = vpop.trf.xlu0
    %v200 = vpop.trf.xlu0
    %v201 = vpop.trf.xlu0
    %v202 = vpop.trf.xlu0
    %v203 = vpop.trf.xlu0
    %v204 = vpop.trf.xlu0
    %v205 = vpop.trf.xlu0
    %v207 = vsel %vm87, %v158, 0
    %209 = vmatpush.msra.mxu0 0.0
    %210 = vmatpush.msra.mxu0 0.0
    %211 = vmatpush.msra.mxu0 0.0
    %212 = vmatpush.msra.mxu0 0.0
    %213 = vmatpush.msra.mxu0 0.0
    %214 = vmatpush.msra.mxu0 0.0
    %215 = vmatpush.msra.mxu0 0.0
    %216 = vmatpush.msra.mxu0 0.0
    %217 = vmatpush.msra.mxu0 0.0
    %218 = vmatpush.msra.mxu0 0.0
    %219 = vmatpush.msra.mxu0 0.0
    %220 = vmatpush.msra.mxu0 0.0
    %221 = vmatpush.msra.mxu0 0.0
    %222 = vmatpush.msra.mxu0 0.0
    %223 = vmatpush.msra.mxu0 0.0
    %224 = vmatpush.msra.mxu0 %v49
    %225 = vmatmul.f32.gmra.mxu0 %v207
    %v226 = vpop.f32.mrf.mxu0
    %v227 = vadd.f32 0.0, %v226
    %228 = vdwg.mxu0
    %v230 = vsel %vm87, %v190, 0
    %232 = vmatpush.msra.mxu0 0.0
    %233 = vmatpush.msra.mxu0 0.0
    %234 = vmatpush.msra.mxu0 0.0
    %235 = vmatpush.msra.mxu0 0.0
    %236 = vmatpush.msra.mxu0 0.0
    %237 = vmatpush.msra.mxu0 0.0
    %238 = vmatpush.msra.mxu0 0.0
    %239 = vmatpush.msra.mxu0 0.0
    %240 = vmatpush.msra.mxu0 0.0
    %241 = vmatpush.msra.mxu0 0.0
    %242 = vmatpush.msra.mxu0 0.0
    %243 = vmatpush.msra.mxu0 0.0
    %244 = vmatpush.msra.mxu0 0.0
    %245 = vmatpush.msra.mxu0 0.0
    %246 = vmatpush.msra.mxu0 0.0
    %247 = vmatpush.msra.mxu0 %v50
    %248 = vmatmul.f32.gmra.mxu0 %v230
    %v249 = vpop.f32.mrf.mxu0
    %v250 = vadd.f32 0.0, %v249
    %251 = vdwg.mxu0
    %v252 = vld [vmem:[%s4] sm:$0xff]
    %v253 = vld [vmem:[%s4 + $0x8] sm:$0xff]
    %v254 = vld [vmem:[%s5] sm:$0x1]
    %v256 = vperm.slane %v254, 0
    %v259 = vsel %vm57, %v227, 0
    %v262 = vsel %vm57, %v250, 0
    %264 = vmatpush.msra.mxu0 0.0
    %265 = vmatpush.msra.mxu0 0.0
    %266 = vmatpush.msra.mxu0 0.0
    %267 = vmatpush.msra.mxu0 0.0
    %268 = vmatpush.msra.mxu0 0.0
    %269 = vmatpush.msra.mxu0 0.0
    %270 = vmatpush.msra.mxu0 0.0
    %271 = vmatpush.msra.mxu0 0.0
    %272 = vmatpush.msra.mxu0 0.0
    %273 = vmatpush.msra.mxu0 0.0
    %274 = vmatpush.msra.mxu0 0.0
    %275 = vmatpush.msra.mxu0 0.0
    %276 = vmatpush.msra.mxu0 0.0
    %277 = vmatpush.msra.mxu0 0.0
    %278 = vmatpush.msra.mxu0 %v253
    %279 = vmatpush.msra.mxu0 %v252
    %280 = vmatmul.f32.gmra.mxu0 %v259
    %v281 = vpop.f32.mrf.mxu0
    %v282 = vadd.f32 %v256, %v281
    %283 = vmatmul.f32.gmra.mxu0 %v262
    %v284 = vpop.f32.mrf.mxu0
    %v285 = vadd.f32 %v256, %v284
    %286 = vdwg.mxu0
    %v287 = vmax.f32 %v282, 0.0
    %v288 = vmax.f32 %v285, 0.0
    %v289 = vld [vmem:[%s6] sm:$0xff]
    %v290 = vld [vmem:[%s6 + $0x8] sm:$0xff]
    %v291 = vld [vmem:[%s7] sm:$0x1]
    %v293 = vperm.slane %v291, 0
    %v296 = vsel %vm57, %v287, 0
    %v299 = vsel %vm57, %v288, 0
    %301 = vmatpush.msra.mxu0 0.0
    %302 = vmatpush.msra.mxu0 0.0
    %303 = vmatpush.msra.mxu0 0.0
    %304 = vmatpush.msra.mxu0 0.0
    %305 = vmatpush.msra.mxu0 0.0
    %306 = vmatpush.msra.mxu0 0.0
    %307 = vmatpush.msra.mxu0 0.0
    %308 = vmatpush.msra.mxu0 0.0
    %309 = vmatpush.msra.mxu0 0.0
    %310 = vmatpush.msra.mxu0 0.0
    %311 = vmatpush.msra.mxu0 0.0
    %312 = vmatpush.msra.mxu0 0.0
    %313 = vmatpush.msra.mxu0 0.0
    %314 = vmatpush.msra.mxu0 0.0
    %315 = vmatpush.msra.mxu0 %v290
    %316 = vmatpush.msra.mxu0 %v289
    %317 = vmatmul.f32.gmra.mxu0 %v296
    %v318 = vpop.f32.mrf.mxu0
    %v319 = vadd.f32 %v293, %v318
    %320 = vmatmul.f32.gmra.mxu0 %v299
    %v321 = vpop.f32.mrf.mxu0
    %v322 = vadd.f32 %v293, %v321
    %323 = vdwg.mxu0
    %v324 = vsel %vm87, %v319, -inf
    %v325 = vrot.slane %v324, 4
    %v326 = vmax.f32 %v324, %v325
    %v327 = vrot.slane %v326, 2
    %v328 = vmax.f32 %v326, %v327
    %v329 = vrot.slane %v328, 1
    %v330 = vmax.f32 %v328, %v329
    %v331 = vsel %vm87, %v322, -inf
    %v332 = vrot.slane %v331, 4
    %v333 = vmax.f32 %v331, %v332
    %v334 = vrot.slane %v333, 2
    %v335 = vmax.f32 %v333, %v334
    %v336 = vrot.slane %v335, 1
    %v337 = vmax.f32 %v335, %v336
    %v338 = vsub.f32 %v319, %v330
    %v339 = vsub.f32 %v322, %v337
    %v340 = vmul.f32 %v338, 1.442695
    %v341 = vpow.pop %v340
    %v342 = vmul.f32 %v339, 1.442695
    %v343 = vpow.pop %v342
    %v344 = vsel %vm87, %v341, 0.0
    %v345 = vrot.slane %v344, 4
    %v346 = vadd.f32 %v344, %v345
    %v347 = vrot.slane %v346, 2
    %v348 = vadd.f32 %v346, %v347
    %v349 = vrot.slane %v348, 1
    %v350 = vadd.f32 %v348, %v349
    %v351 = vsel %vm87, %v343, 0.0
    %v352 = vrot.slane %v351, 4
    %v353 = vadd.f32 %v351, %v352
    %v354 = vrot.slane %v353, 2
    %v355 = vadd.f32 %v353, %v354
    %v356 = vrot.slane %v355, 1
    %v357 = vadd.f32 %v355, %v356
    %v358 = vrcp.pop %v350
    %v359 = vrcp.pop %v357
    %v360 = vmul.f32 %v341, %v358
    %v361 = vmul.f32 %v343, %v359
    %362 = vst.msk [vmem:[#allocation6] sm:$0xff] %vm87, %v360
    %363 = vst.msk [vmem:[#allocation6 + $0x8] sm:$0xff] %vm87, %v361
    %v364 = vmul.f32 %v360, %v134
    %v365 = vmul.f32 %v361, %v138
    %366 = vxpose.xlu0.b32.start [1/16] %v364, 128
    %367 = vxpose.xlu0.b32.cont [2/16] 0.0, 128
    %368 = vxpose.xlu0.b32.cont [3/16] 0.0, 128
    %369 = vxpose.xlu0.b32.cont [4/16] 0.0, 128
    %370 = vxpose.xlu0.b32.cont [5/16] 0.0, 128
    %371 = vxpose.xlu0.b32.cont [6/16] 0.0, 128
    %372 = vxpose.xlu0.b32.cont [7/16] 0.0, 128
    %373 = vxpose.xlu0.b32.cont [8/16] 0.0, 128
    %374 = vxpose.xlu0.b32.cont [9/16] 0.0, 128
    %375 = vxpose.xlu0.b32.cont [10/16] 0.0, 128
    %376 = vxpose.xlu0.b32.cont [11/16] 0.0, 128
    %377 = vxpose.xlu0.b32.cont [12/16] 0.0, 128
    %378 = vxpose.xlu0.b32.cont [13/16] 0.0, 128
    %379 = vxpose.xlu0.b32.cont [14/16] 0.0, 128
    %380 = vxpose.xlu0.b32.cont [15/16] 0.0, 128
    %381 = vxpose.xlu0.b32.end [16/16] 0.0, 128
    %v382 = vpop.trf.xlu0
    %v383 = vpop.trf.xlu0
    %v384 = vpop.trf.xlu0
    %v385 = vpop.trf.xlu0
    %v386 = vpop.trf.xlu0
    %v387 = vpop.trf.xlu0
    %v388 = vpop.trf.xlu0
    %v389 = vpop.trf.xlu0
    %v390 = vpop.trf.xlu0
    %v391 = vpop.trf.xlu0
    %v392 = vpop.trf.xlu0
    %v393 = vpop.trf.xlu0
    %v394 = vpop.trf.xlu0
    %v395 = vpop.trf.xlu0
    %v396 = vpop.trf.xlu0
    %v397 = vpop.trf.xlu0
    %398 = vxpose.xlu0.b32.start [1/16] %v365, 128
    %399 = vxpose.xlu0.b32.cont [2/16] 0.0, 128
    %400 = vxpose.xlu0.b32.cont [3/16] 0.0, 128
    %401 = vxpose.xlu0.b32.cont [4/16] 0.0, 128
    %402 = vxpose.xlu0.b32.cont [5/16] 0.0, 128
    %403 = vxpose.xlu0.b32.cont [6/16] 0.0, 128
    %404 = vxpose.xlu0.b32.cont [7/16] 0.0, 128
    %405 = vxpose.xlu0.b32.cont [8/16] 0.0, 128
    %406 = vxpose.xlu0.b32.cont [9/16] 0.0, 128
    %407 = vxpose.xlu0.b32.cont [10/16] 0.0, 128
    %408 = vxpose.xlu0.b32.cont [11/16] 0.0, 128
    %409 = vxpose.xlu0.b32.cont [12/16] 0.0, 128
    %410 = vxpose.xlu0.b32.cont [13/16] 0.0, 128
    %411 = vxpose.xlu0.b32.cont [14/16] 0.0, 128
    %412 = vxpose.xlu0.b32.cont [15/16] 0.0, 128
    %413 = vxpose.xlu0.b32.end [16/16] 0.0, 128
    %v414 = vpop.trf.xlu0
    %v415 = vpop.trf.xlu0
    %v416 = vpop.trf.xlu0
    %v417 = vpop.trf.xlu0
    %v418 = vpop.trf.xlu0
    %v419 = vpop.trf.xlu0
    %v420 = vpop.trf.xlu0
    %v421 = vpop.trf.xlu0
    %v422 = vpop.trf.xlu0
    %v423 = vpop.trf.xlu0
    %v424 = vpop.trf.xlu0
    %v425 = vpop.trf.xlu0
    %v426 = vpop.trf.xlu0
    %v427 = vpop.trf.xlu0
    %v428 = vpop.trf.xlu0
    %v429 = vpop.trf.xlu0
    %v431 = vsel %vm87, %v382, 0
    %433 = vmatpush.msra.mxu0 0.0
    %434 = vmatpush.msra.mxu0 0.0
    %435 = vmatpush.msra.mxu0 0.0
    %436 = vmatpush.msra.mxu0 0.0
    %437 = vmatpush.msra.mxu0 0.0
    %438 = vmatpush.msra.mxu0 0.0
    %439 = vmatpush.msra.mxu0 0.0
    %440 = vmatpush.msra.mxu0 0.0
    %441 = vmatpush.msra.mxu0 0.0
    %442 = vmatpush.msra.mxu0 0.0
    %443 = vmatpush.msra.mxu0 0.0
    %444 = vmatpush.msra.mxu0 0.0
    %445 = vmatpush.msra.mxu0 0.0
    %446 = vmatpush.msra.mxu0 0.0
    %447 = vmatpush.msra.mxu0 0.0
    %448 = vmatpush.msra.mxu0 %v287
    %449 = vmatmul.f32.gmra.mxu0 %v431
    %v450 = vpop.f32.mrf.mxu0
    %v451 = vadd.f32 %v227, %v450
    %452 = vdwg.mxu0
    %v454 = vsel %vm87, %v414, 0
    %456 = vmatpush.msra.mxu0 0.0
    %457 = vmatpush.msra.mxu0 0.0
    %458 = vmatpush.msra.mxu0 0.0
    %459 = vmatpush.msra.mxu0 0.0
    %460 = vmatpush.msra.mxu0 0.0
    %461 = vmatpush.msra.mxu0 0.0
    %462 = vmatpush.msra.mxu0 0.0
    %463 = vmatpush.msra.mxu0 0.0
    %464 = vmatpush.msra.mxu0 0.0
    %465 = vmatpush.msra.mxu0 0.0
    %466 = vmatpush.msra.mxu0 0.0
    %467 = vmatpush.msra.mxu0 0.0
    %468 = vmatpush.msra.mxu0 0.0
    %469 = vmatpush.msra.mxu0 0.0
    %470 = vmatpush.msra.mxu0 0.0
    %471 = vmatpush.msra.mxu0 %v288
    %472 = vmatmul.f32.gmra.mxu0 %v454
    %v473 = vpop.f32.mrf.mxu0
    %v474 = vadd.f32 %v250, %v473
    %475 = vdwg.mxu0
    %v476 = vld [vmem:[%s8] sm:$0xff]
    %v477 = vld [vmem:[%s8 + $0x8] sm:$0xff]
    %v478 = vld [vmem:[%s9] sm:$0x1]
    %v480 = vperm.slane %v478, 0
    %v483 = vsel %vm57, %v451, 0
    %v486 = vsel %vm57, %v474, 0
    %488 = vmatpush.msra.mxu0 0.0
    %489 = vmatpush.msra.mxu0 0.0
    %490 = vmatpush.msra.mxu0 0.0
    %491 = vmatpush.msra.mxu0 0.0
    %492 = vmatpush.msra.mxu0 0.0
    %493 = vmatpush.msra.mxu0 0.0
    %494 = vmatpush.msra.mxu0 0.0
    %495 = vmatpush.msra.mxu0 0.0
    %496 = vmatpush.msra.mxu0 0.0
    %497 = vmatpush.msra.mxu0 0.0
    %498 = vmatpush.msra.mxu0 0.0
    %499 = vmatpush.msra.mxu0 0.0
    %500 = vmatpush.msra.mxu0 0.0
    %501 = vmatpush.msra.mxu0 0.0
    %502 = vmatpush.msra.mxu0 %v477
    %503 = vmatpush.msra.mxu0 %v476
    %504 = vmatmul.f32.gmra.mxu0 %v483
    %v505 = vpop.f32.mrf.mxu0
    %v506 = vadd.f32 %v480, %v505
    %507 = vmatmul.f32.gmra.mxu0 %v486
    %v508 = vpop.f32.mrf.mxu0
    %v509 = vadd.f32 %v480, %v508
    %510 = vdwg.mxu0
    %v511 = vmax.f32 %v506, 0.0
    %v512 = vmax.f32 %v509, 0.0
    %v513 = vld [vmem:[%s10] sm:$0xff]
    %v514 = vld [vmem:[%s10 + $0x8] sm:$0xff]
    %v515 = vld [vmem:[%s10 + $0x10] sm:$0xff]
    %v516 = vld [vmem:[%s10 + $0x18] sm:$0xff]
    %v517 = vld [vmem:[%s10 + $0x20] sm:$0xff]
    %v518 = vld [vmem:[%s10 + $0x28] sm:$0xff]
    %v519 = vld [vmem:[%s10 + $0x30] sm:$0xff]
    %v520 = vld [vmem:[%s10 + $0x38] sm:$0xff]
    %v521 = vld [vmem:[%s11] sm:$0x1]
    %v523 = vperm.slane %v521, 0
    %vm525 = vcmask 523264
    %v527 = vsel %vm525, %v511, 0
    %v530 = vsel %vm525, %v512, 0
    %532 = vmatpush.msra.mxu0 0.0
    %533 = vmatpush.msra.mxu0 0.0
    %534 = vmatpush.msra.mxu0 0.0
    %535 = vmatpush.msra.mxu0 0.0
    %536 = vmatpush.msra.mxu0 0.0
    %537 = vmatpush.msra.mxu0 0.0
    %538 = vmatpush.msra.mxu0 0.0
    %539 = vmatpush.msra.mxu0 0.0
    %540 = vmatpush.msra.mxu0 %v520
    %541 = vmatpush.msra.mxu0 %v519
    %542 = vmatpush.msra.mxu0 %v518
    %543 = vmatpush.msra.mxu0 %v517
    %544 = vmatpush.msra.mxu0 %v516
    %545 = vmatpush.msra.mxu0 %v515
    %546 = vmatpush.msra.mxu0 %v514
    %547 = vmatpush.msra.mxu0 %v513
    %548 = vmatmul.f32.gmra.mxu0 %v527
    %v549 = vpop.f32.mrf.mxu0
    %v550 = vadd.f32 %v523, %v549
    %551 = vmatmul.f32.gmra.mxu0 %v530
    %v552 = vpop.f32.mrf.mxu0
    %v553 = vadd.f32 %v523, %v552
    %554 = vdwg.mxu0
    %vm555 = vcmask 31744
    %v556 = vsel %vm555, %v550, -inf
    %v557 = vrot.slane %v556, 4
    %v558 = vmax.f32 %v556, %v557
    %v559 = vrot.slane %v558, 2
    %v560 = vmax.f32 %v558, %v559
    %v561 = vrot.slane %v560, 1
    %v562 = vmax.f32 %v560, %v561
    %v563 = vsel %vm555, %v553, -inf
    %v564 = vrot.slane %v563, 4
    %v565 = vmax.f32 %v563, %v564
    %v566 = vrot.slane %v565, 2
    %v567 = vmax.f32 %v565, %v566
    %v568 = vrot.slane %v567, 1
    %v569 = vmax.f32 %v567, %v568
    %v570 = vsub.f32 %v550, %v562
    %v571 = vsub.f32 %v553, %v569
    %v572 = vmul.f32 %v570, 1.442695
    %v573 = vpow.pop %v572
    %v574 = vmul.f32 %v571, 1.442695
    %v575 = vpow.pop %v574
    %v576 = vsel %vm555, %v573, 0.0
    %v577 = vrot.slane %v576, 4
    %v578 = vadd.f32 %v576, %v577
    %v579 = vrot.slane %v578, 2
    %v580 = vadd.f32 %v578, %v579
    %v581 = vrot.slane %v580, 1
    %v582 = vadd.f32 %v580, %v581
    %v583 = vsel %vm555, %v575, 0.0
    %v584 = vrot.slane %v583, 4
    %v585 = vadd.f32 %v583, %v584
    %v586 = vrot.slane %v585, 2
    %v587 = vadd.f32 %v585, %v586
    %v588 = vrot.slane %v587, 1
    %v589 = vadd.f32 %v587, %v588
    %v590 = vrcp.pop %v582
    %v591 = vrcp.pop %v589
    %v592 = vmul.f32 %v573, %v590
    %v593 = vmul.f32 %v575, %v591
    %594 = vst.msk [vmem:[%s15] sm:$0xff] %vm555, %v592
    %595 = vst.msk [vmem:[%s15 + $0x8] sm:$0xff] %vm555, %v593
    %v596 = vmul.f32 %v592, %v134
    %v597 = vmul.f32 %v593, %v138
    %598 = vxpose.xlu0.b32.start [1/16] %v596, 128
    %599 = vxpose.xlu0.b32.cont [2/16] 0.0, 128
    %600 = vxpose.xlu0.b32.cont [3/16] 0.0, 128
    %601 = vxpose.xlu0.b32.cont [4/16] 0.0, 128
    %602 = vxpose.xlu0.b32.cont [5/16] 0.0, 128
    %603 = vxpose.xlu0.b32.cont [6/16] 0.0, 128
    %604 = vxpose.xlu0.b32.cont [7/16] 0.0, 128
    %605 = vxpose.xlu0.b32.cont [8/16] 0.0, 128
    %606 = vxpose.xlu0.b32.cont [9/16] 0.0, 128
    %607 = vxpose.xlu0.b32.cont [10/16] 0.0, 128
    %608 = vxpose.xlu0.b32.cont [11/16] 0.0, 128
    %609 = vxpose.xlu0.b32.cont [12/16] 0.0, 128
    %610 = vxpose.xlu0.b32.cont [13/16] 0.0, 128
    %611 = vxpose.xlu0.b32.cont [14/16] 0.0, 128
    %612 = vxpose.xlu0.b32.cont [15/16] 0.0, 128
    %613 = vxpose.xlu0.b32.end [16/16] 0.0, 128
    %v614 = vpop.trf.xlu0
    %v615 = vpop.trf.xlu0
    %v616 = vpop.trf.xlu0
    %v617 = vpop.trf.xlu0
    %v618 = vpop.trf.xlu0
    %v619 = vpop.trf.xlu0
    %v620 = vpop.trf.xlu0
    %v621 = vpop.trf.xlu0
    %v622 = vpop.trf.xlu0
    %v623 = vpop.trf.xlu0
    %v624 = vpop.trf.xlu0
    %v625 = vpop.trf.xlu0
    %v626 = vpop.trf.xlu0
    %v627 = vpop.trf.xlu0
    %v628 = vpop.trf.xlu0
    %v629 = vpop.trf.xlu0
    %630 = vxpose.xlu0.b32.start [1/16] %v597, 128
    %631 = vxpose.xlu0.b32.cont [2/16] 0.0, 128
    %632 = vxpose.xlu0.b32.cont [3/16] 0.0, 128
    %633 = vxpose.xlu0.b32.cont [4/16] 0.0, 128
    %634 = vxpose.xlu0.b32.cont [5/16] 0.0, 128
    %635 = vxpose.xlu0.b32.cont [6/16] 0.0, 128
    %636 = vxpose.xlu0.b32.cont [7/16] 0.0, 128
    %637 = vxpose.xlu0.b32.cont [8/16] 0.0, 128
    %638 = vxpose.xlu0.b32.cont [9/16] 0.0, 128
    %639 = vxpose.xlu0.b32.cont [10/16] 0.0, 128
    %640 = vxpose.xlu0.b32.cont [11/16] 0.0, 128
    %641 = vxpose.xlu0.b32.cont [12/16] 0.0, 128
    %642 = vxpose.xlu0.b32.cont [13/16] 0.0, 128
    %643 = vxpose.xlu0.b32.cont [14/16] 0.0, 128
    %644 = vxpose.xlu0.b32.cont [15/16] 0.0, 128
    %645 = vxpose.xlu0.b32.end [16/16] 0.0, 128
    %v646 = vpop.trf.xlu0
    %v647 = vpop.trf.xlu0
    %v648 = vpop.trf.xlu0
    %v649 = vpop.trf.xlu0
    %v650 = vpop.trf.xlu0
    %v651 = vpop.trf.xlu0
    %v652 = vpop.trf.xlu0
    %v653 = vpop.trf.xlu0
    %v654 = vpop.trf.xlu0
    %v655 = vpop.trf.xlu0
    %v656 = vpop.trf.xlu0
    %v657 = vpop.trf.xlu0
    %v658 = vpop.trf.xlu0
    %v659 = vpop.trf.xlu0
    %v660 = vpop.trf.xlu0
    %v661 = vpop.trf.xlu0
    %v663 = vsel %vm87, %v614, 0
    %665 = vmatpush.msra.mxu0 0.0
    %666 = vmatpush.msra.mxu0 0.0
    %667 = vmatpush.msra.mxu0 0.0
    %668 = vmatpush.msra.mxu0 0.0
    %669 = vmatpush.msra.mxu0 0.0
    %670 = vmatpush.msra.mxu0 0.0
    %671 = vmatpush.msra.mxu0 0.0
    %672 = vmatpush.msra.mxu0 0.0
    %673 = vmatpush.msra.mxu0 0.0
    %674 = vmatpush.msra.mxu0 0.0
    %675 = vmatpush.msra.mxu0 0.0
    %676 = vmatpush.msra.mxu0 0.0
    %677 = vmatpush.msra.mxu0 0.0
    %678 = vmatpush.msra.mxu0 0.0
    %679 = vmatpush.msra.mxu0 0.0
    %680 = vmatpush.msra.mxu0 %v511
    %681 = vmatmul.f32.gmra.mxu0 %v663
    %v682 = vpop.f32.mrf.mxu0
    %v683 = vadd.f32 0.0, %v682
    %684 = vdwg.mxu0
    %v686 = vsel %vm87, %v646, 0
    %688 = vmatpush.msra.mxu0 0.0
    %689 = vmatpush.msra.mxu0 0.0
    %690 = vmatpush.msra.mxu0 0.0
    %691 = vmatpush.msra.mxu0 0.0
    %692 = vmatpush.msra.mxu0 0.0
    %693 = vmatpush.msra.mxu0 0.0
    %694 = vmatpush.msra.mxu0 0.0
    %695 = vmatpush.msra.mxu0 0.0
    %696 = vmatpush.msra.mxu0 0.0
    %697 = vmatpush.msra.mxu0 0.0
    %698 = vmatpush.msra.mxu0 0.0
    %699 = vmatpush.msra.mxu0 0.0
    %700 = vmatpush.msra.mxu0 0.0
    %701 = vmatpush.msra.mxu0 0.0
    %702 = vmatpush.msra.mxu0 0.0
    %703 = vmatpush.msra.mxu0 %v512
    %704 = vmatmul.f32.gmra.mxu0 %v686
    %v705 = vpop.f32.mrf.mxu0
    %v706 = vadd.f32 0.0, %v705
    %707 = vdwg.mxu0
    %vm708 = vcmask 519168
    %709 = vst.msk [vmem:[#allocation2] sm:$0xf] %vm708, %v683
    %710 = vst.msk [vmem:[#allocation2 + $0x4] sm:$0xf] %vm708, %v706
    // Predicated region
    $region50: #{tpu_custom_call.1} parent=1 // pred_check
      _
    $region51: #{tpu_custom_call.1} parent=1 // pred_check_branch
      %712 = sbr.rel (0) target = $region53
    $region52: #{tpu_custom_call.1} parent=1 // pred_region
      %714 = vsyncadd [#allocation3], 0
      %s715 = sshll.u32 [#allocation2], 4
      %s716 = int_to_ptr.vmem [resolvable:$true] %s715
      %s717 = sshll.u32 %s12, 4
      %s718 = int_to_ptr.hbm [resolvable:$true] %s717
      %723 = dma.vmem_to_hbm [thread:$0]  %s716, 128, %s718, [#allocation3], 64, 64, 4
    $region53: #{tpu_custom_call.1} parent=1 // pred_fallthru
      _
    // Predicated region
    $region54: #{tpu_custom_call.1} parent=1 // pred_check
      _
    $region55: #{tpu_custom_call.1} parent=1 // pred_check_branch
      %725 = sbr.rel (0) target = $region57
    $region56: #{tpu_custom_call.1} parent=1 // pred_region
      %727 = vsyncadd [#allocation5], 0
      %s728 = sshll.u32 [#allocation4], 4
      %s729 = int_to_ptr.vmem [resolvable:$true] %s728
      %s730 = sshll.u32 %s13, 4
      %s731 = int_to_ptr.hbm [resolvable:$true] %s730
      %736 = dma.vmem_to_hbm [thread:$0]  %s729, 256, %s731, [#allocation5], 128, 128, 8
    $region57: #{tpu_custom_call.1} parent=1 // pred_fallthru
      _
    // Predicated region
    $region58: #{tpu_custom_call.1} parent=1 // pred_check
      _
    $region59: #{tpu_custom_call.1} parent=1 // pred_check_branch
      %738 = sbr.rel (0) target = $region61
    $region60: #{tpu_custom_call.1} parent=1 // pred_region
      %740 = vsyncadd [#allocation5], 0
      %s741 = sshll.u32 [#allocation6], 4
      %s742 = int_to_ptr.vmem [resolvable:$true] %s741
      %s743 = sshll.u32 %s14, 4
      %s744 = int_to_ptr.hbm [resolvable:$true] %s743
      %749 = dma.vmem_to_hbm [thread:$0]  %s742, 256, %s744, [#allocation5], 128, 128, 8
    $region61: #{tpu_custom_call.1} parent=1 // pred_fallthru
      _
    // Predicated region
    $region62: #{tpu_custom_call.1} parent=1 // pred_check
      _
    $region63: #{tpu_custom_call.1} parent=1 // pred_check_branch
      %751 = sbr.rel (0) target = $region65
    $region64: #{tpu_custom_call.1} parent=1 // pred_region
      _
    $region65: #{tpu_custom_call.1} parent=1 // pred_fallthru
      _
    // Predicated region
    $region66: #{tpu_custom_call.1} parent=1 // pred_check
      _
    $region67: #{tpu_custom_call.1} parent=1 // pred_check_branch
      %753 = sbr.rel (0) target = $region69
    $region68: #{tpu_custom_call.1} parent=1 // pred_region
      %755 = dma.done [#allocation3], 128
    $region69: #{tpu_custom_call.1} parent=1 // pred_fallthru
      _
    // Predicated region
    $region70: #{tpu_custom_call.1} parent=1 // pred_check
      _
    $region71: #{tpu_custom_call.1} parent=1 // pred_check_branch
      %757 = sbr.rel (0) target = $region73
    $region72: #{tpu_custom_call.1} parent=1 // pred_region
      %759 = dma.done [#allocation5], 256
    $region73: #{tpu_custom_call.1} parent=1 // pred_fallthru
      _
    // Predicated region
    $region74: #{tpu_custom_call.1} parent=1 // pred_check
      _
    $region75: #{tpu_custom_call.1} parent=1 // pred_check_branch
      %761 = sbr.rel (0) target = $region77
    $region76: #{tpu_custom_call.1} parent=1 // pred_region
      %763 = dma.done [#allocation5], 256
    $region77: #{tpu_custom_call.1} parent=1 // pred_fallthru
      _
    // Predicated region
    $region78: #{tpu_custom_call.1} parent=1 // pred_check
      _
    $region79: #{tpu_custom_call.1} parent=1 // pred_check_branch
      %765 = sbr.rel (0) target = $region81
    $region80: #{tpu_custom_call.1} parent=1 // pred_region
      _
    $region81: #{tpu_custom_call.1} parent=1 // pred_fallthru
      _
    %766 = vsyncpa [#allocation3], 1
    %767 = vsyncpa [#allocation5], 1

</llo_original>
